<compile_context>
chip_gen: v6e
topology: v6e:2x2x1
jax: 0.10.0
libtpu: 0.0.40
codegen_flags: <defaults>
</compile_context>

<pallas_src>
import functools

import jax
import jax.numpy as jnp
from jax.experimental import pallas as pl
from jax.experimental.pallas import tpu as pltpu

H1, H2, LANES = 24, 48, 128


def _round_up(n, m):
    return ((n + m - 1) // m) * m


def _slab_layout(act):
    """Row offsets of the three augmented weight blocks inside the packed slab."""
    r1 = 0
    r2 = _round_up(H1 + 1, 8)                # 32
    rh = r2 + _round_up(H2 + 1, 8)           # 88
    hr = _round_up(act + 1, 8)               # 8 (actor logits + critic, padded)
    n_rows = rh + hr                         # 96
    return r1, r2, rh, hr, n_rows


def _choose_batch_tile(B):
    """Lane-dense batch tile: as few steps as possible (per-step overhead ~0.35us),
    256-aligned for the v6e/v7x MXU, and >=2 steps when the batch is big enough
    so the 'parallel' axis shards across both TensorCores on v7x."""
    if B >= 512:
        return min(1024, _round_up(pl.cdiv(B, 2), 256))
    return _round_up(B, 128)


def _actor_critic_kernel(x_ref, w_ref, out_ref, *, obs, act, r2, rh, hr):
    # x_ref: (obs+1, TB) with row `obs` == 1.0 (bias/ones row), batch on lanes.
    x_aug = x_ref[...]

    # layer 1: [W1^T | b1 ; ones-forwarder] @ x_aug -> (H1+1, TB); row H1 stays 1.
    a1 = jnp.maximum(
        jnp.dot(w_ref[0:H1 + 1, 0:obs + 1], x_aug,
                preferred_element_type=jnp.float32), 0.0)

    # layer 2: (H2+1, H1+1) @ (H1+1, TB) -> (H2+1, TB); row H2 stays 1.
    a2 = jnp.maximum(
        jnp.dot(w_ref[r2:r2 + H2 + 1, 0:H1 + 1], a1,
                preferred_element_type=jnp.float32), 0.0)

    # fused actor+critic head: (hr, H2+1) @ (H2+1, TB) -> (hr, TB)
    # rows 0..act-1 = actor logits, row act = q, rows beyond = 0.
    heads = jnp.dot(w_ref[rh:rh + hr, 0:H2 + 1], a2,
                    preferred_element_type=jnp.float32)

    # masked softmax over the first `act` SUBLANES (cheap 8-row reduce).
    row = jax.lax.broadcasted_iota(jnp.int32, heads.shape, 0)
    is_act = row < act
    logits = jnp.where(is_act, heads, jnp.float32(-1e30))
    m = jnp.max(logits, axis=0, keepdims=True)          # (1, TB)
    e = jnp.exp(logits - m)                              # masked rows underflow to 0
    denom = jnp.sum(e, axis=0, keepdims=True)            # (1, TB)
    dist = e / denom                                     # exact normalization

    # rows [0:act] = softmax, row act = q_value, remaining rows = 0
    out_ref[...] = jnp.where(row == act, heads, dist)


def pack_params(params, observation_space, action_space):
    """Pack the 8 Linear params into ONE augmented, transposed slab (call once)."""
    obs, act = observation_space, action_space
    assert obs + 1 <= LANES and H1 + 1 <= LANES and H2 + 1 <= LANES
    r1, r2, rh, hr, n_rows = _slab_layout(act)

    slab = jnp.zeros((n_rows, LANES), jnp.float32)
    # layer 1: [W1^T | b1] with a row that forwards the constant-1 feature
    slab = slab.at[r1:r1 + H1, 0:obs].set(params["w1"].T)
    slab = slab.at[r1:r1 + H1, obs].set(params["b1"][0])
    slab = slab.at[r1 + H1, obs].set(1.0)
    # layer 2: [W2^T | b2] + ones forwarder
    slab = slab.at[r2:r2 + H2, 0:H1].set(params["w2"].T)
    slab = slab.at[r2:r2 + H2, H1].set(params["b2"][0])
    slab = slab.at[r2 + H2, H1].set(1.0)
    # fused heads: rows 0..act-1 actor, row act critic, biases in column H2
    slab = slab.at[rh:rh + act, 0:H2].set(params["wa"].T)
    slab = slab.at[rh:rh + act, H2].set(params["ba"][0])
    slab = slab.at[rh + act, 0:H2].set(params["wc"][:, 0])
    slab = slab.at[rh + act, H2].set(params["bc"][0, 0])
    return slab


@functools.partial(jax.jit, static_argnames=("act",))
def actor_critic_forward(x, wbslab, *, act):
    """x: (B, obs) f32.  wbslab from pack_params.  Returns (dist (B,act), q (B,1))."""
    B, obs = x.shape
    _, r2, rh, hr, n_rows = _slab_layout(act)

    TB = _choose_batch_tile(B)
    nsteps = pl.cdiv(B, TB)
    B_pad = nsteps * TB

    # feature-major, bias-augmented, explicitly padded input (batch on lanes)
    xt = jnp.concatenate([x.T, jnp.ones((1, B), x.dtype)], axis=0)   # (obs+1, B)
    xt = jnp.pad(xt, ((0, 0), (0, B_pad - B)))                       # (obs+1, B_pad)

    kernel = functools.partial(_actor_critic_kernel, obs=obs, act=act,
                               r2=r2, rh=rh, hr=hr)

    out = pl.pallas_call(
        kernel,
        out_shape=jax.ShapeDtypeStruct((hr, B_pad), jnp.float32),
        grid=(nsteps,),
        in_specs=[
            pl.BlockSpec((obs + 1, TB), lambda i: (0, i)),       # lane-dense x tile
            pl.BlockSpec((n_rows, LANES), lambda i: (0, 0)),     # VMEM-resident slab
        ],
        out_specs=pl.BlockSpec((hr, TB), lambda i: (0, i)),      # lane-dense (8,TB)
        compiler_params=pltpu.CompilerParams(
            dimension_semantics=("parallel",)),
    )(xt, wbslab)

    # NOTE: downstream consumers (sampling / losses) should take the packed
    # (hr, B) slab directly; the slices below are only for the (dist, q) API
    # and stream a slab that is already ~16x smaller than a (B,128) layout.
    dist = out[:act, :B].T              # (B, act)
    q = out[act:act + 1, :B].T          # (B, 1)
    return dist, q


def init_params(key, observation_space, action_space):
    """Deterministic init mimicking torch.nn.Linear default: U(-1/sqrt(fan_in), +1/sqrt(fan_in))."""
    def linear(key, fan_in, fan_out):
        kw, kb = jax.random.split(key)
        bound = 1.0 / jnp.sqrt(jnp.float32(fan_in))
        w = jax.random.uniform(kw, (fan_in, fan_out), jnp.float32, -bound, bound)
        b = jax.random.uniform(kb, (1, fan_out), jnp.float32, -bound, bound)
        return w, b

    k1, k2, k3, k4 = jax.random.split(key, 4)
    w1, b1 = linear(k1, observation_space, H1)
    w2, b2 = linear(k2, H1, H2)
    wa, ba = linear(k3, H2, action_space)
    wc, bc = linear(k4, H2, 1)
    return dict(w1=w1, b1=b1, w2=w2, b2=b2, wa=wa, ba=ba, wc=wc, bc=bc)


def reference_forward(x, p):
    """Pure-JAX reference of the PyTorch module's forward."""
    h1 = jax.nn.relu(x @ p["w1"] + p["b1"])
    h2 = jax.nn.relu(h1 @ p["w2"] + p["b2"])
    dist = jax.nn.softmax(h2 @ p["wa"] + p["ba"], axis=-1)
    q = h2 @ p["wc"] + p["bc"]
    return dist, q


if __name__ == "__main__":
    # CartPole-v0: observation_space = 4, action_space = 2.
    # Batch many environments per call; 512 -> two 256-wide lane-dense tiles
    # (256-aligned for v6e/v7x MXU, two parallel steps to feed both v7x TCs).
    OBS, ACT, BATCH = 4, 2, 512

    key = jax.random.PRNGKey(0)
    k_params, k_x = jax.random.split(key)

    params = init_params(k_params, OBS, ACT)
    wbslab = pack_params(params, OBS, ACT)        # done once, outside hot path
    x = jax.random.normal(k_x, (BATCH, OBS), jnp.float32)

    dist, q = actor_critic_forward(x, wbslab, act=ACT)
    dist, q = jax.block_until_ready((dist, q))

    # sanity-check against the pure-JAX reference
    dist_ref, q_ref = reference_forward(x, params)
    assert dist.shape == (BATCH, ACT) and q.shape == (BATCH, 1)
    assert jnp.allclose(q, q_ref, atol=2e-3, rtol=2e-3)
    assert jnp.allclose(dist, dist_ref, atol=2e-3, rtol=2e-3)
    # exact normalization -> probabilities sum to 1 to f32 rounding
    assert jnp.allclose(jnp.sum(dist, axis=-1), 1.0, atol=1e-4)

    print("KERNEL_OK")
</pallas_src>

<mosaic_0001>
module attributes {stable_mosaic.version = 11 : i64} {
  func.func @_actor_critic_kernel(%arg0: i32, %arg1: memref<5x256xf32, #tpu.memory_space<vmem>>, %arg2: memref<96x128xf32, #tpu.memory_space<vmem>>, %arg3: memref<8x256xf32, #tpu.memory_space<vmem>>) attributes {dimension_semantics = [#tpu.dimension_semantics<parallel>], iteration_bounds = array<i64: 2>, scalar_prefetch = 0 : i64, scratch_operands = 0 : i64, tpu.core_type = #tpu.core_type<tc>, window_params = [{transform_indices = @transform_0, window_bounds = array<i64: 5, 256>}, {pipeline_mode = #tpu.pipeline_mode<synchronous>, transform_indices = @transform_1, window_bounds = array<i64: 96, 128>}, {transform_indices = @transform_2, window_bounds = array<i64: 8, 256>}]} {
    %c0 = arith.constant 0 : index
    %c0_0 = arith.constant 0 : index
    %0 = vector.load %arg1[%c0, %c0_0] : memref<5x256xf32, #tpu.memory_space<vmem>>, vector<5x256xf32>
    %c0_1 = arith.constant 0 : index
    %c0_2 = arith.constant 0 : index
    %1 = vector.load %arg2[%c0_1, %c0_2] : memref<96x128xf32, #tpu.memory_space<vmem>>, vector<25x5xf32>
    %cst = arith.constant dense<0.000000e+00> : vector<25x256xf32>
    %2 = tpu.matmul %1, %0, %cst {dimension_numbers = #tpu.dot_dimension_numbers<[1], [0], [0], [1], [0, 0, 1, 1], [], []>} : vector<25x5xf32>, vector<5x256xf32>, vector<25x256xf32> -> vector<25x256xf32>
    %cst_3 = arith.constant 0.000000e+00 : f32
    %3 = vector.broadcast %cst_3 : f32 to vector<25x256xf32>
    %4 = arith.maximumf %2, %3 : vector<25x256xf32>
    %c32 = arith.constant 32 : index
    %c0_4 = arith.constant 0 : index
    %5 = vector.load %arg2[%c32, %c0_4] : memref<96x128xf32, #tpu.memory_space<vmem>>, vector<49x25xf32>
    %cst_5 = arith.constant dense<0.000000e+00> : vector<49x256xf32>
    %6 = tpu.matmul %5, %4, %cst_5 {dimension_numbers = #tpu.dot_dimension_numbers<[1], [0], [0], [1], [0, 0, 1, 1], [], []>} : vector<49x25xf32>, vector<25x256xf32>, vector<49x256xf32> -> vector<49x256xf32>
    %cst_6 = arith.constant 0.000000e+00 : f32
    %7 = vector.broadcast %cst_6 : f32 to vector<49x256xf32>
    %8 = arith.maximumf %6, %7 : vector<49x256xf32>
    %c88 = arith.constant 88 : index
    %c0_7 = arith.constant 0 : index
    %9 = vector.load %arg2[%c88, %c0_7] : memref<96x128xf32, #tpu.memory_space<vmem>>, vector<8x49xf32>
    %cst_8 = arith.constant dense<0.000000e+00> : vector<8x256xf32>
    %10 = tpu.matmul %9, %8, %cst_8 {dimension_numbers = #tpu.dot_dimension_numbers<[1], [0], [0], [1], [0, 0, 1, 1], [], []>} : vector<8x49xf32>, vector<49x256xf32>, vector<8x256xf32> -> vector<8x256xf32>
    %11 = tpu.iota {dimensions = array<i32: 0>} : vector<8x256xi32>
    %c2_i32 = arith.constant 2 : i32
    %12 = vector.broadcast %c2_i32 : i32 to vector<8x256xi32>
    %13 = arith.cmpi slt, %11, %12 : vector<8x256xi32>
    %cst_9 = arith.constant -1.000000e+30 : f32
    %14 = vector.broadcast %cst_9 : f32 to vector<8x256xf32>
    %15 = arith.select %13, %10, %14 : vector<8x256xi1>, vector<8x256xf32>
    %cst_10 = arith.constant dense<0xFF800000> : vector<256xf32>
    %16 = vector.multi_reduction <maximumf>, %15, %cst_10 [0] : vector<8x256xf32> to vector<256xf32>
    %17 = vector.shape_cast %16 : vector<256xf32> to vector<1x256xf32>
    %18 = vector.broadcast %17 : vector<1x256xf32> to vector<8x256xf32>
    %19 = arith.subf %15, %18 : vector<8x256xf32>
    %20 = math.exp %19 : vector<8x256xf32>
    %cst_11 = arith.constant dense<0.000000e+00> : vector<256xf32>
    %21 = vector.multi_reduction <add>, %20, %cst_11 [0] : vector<8x256xf32> to vector<256xf32>
    %22 = vector.shape_cast %21 : vector<256xf32> to vector<1x256xf32>
    %23 = vector.broadcast %22 : vector<1x256xf32> to vector<8x256xf32>
    %24 = arith.divf %20, %23 : vector<8x256xf32>
    %c2_i32_12 = arith.constant 2 : i32
    %25 = vector.broadcast %c2_i32_12 : i32 to vector<8x256xi32>
    %26 = arith.cmpi eq, %11, %25 : vector<8x256xi32>
    %27 = arith.select %26, %10, %24 : vector<8x256xi1>, vector<8x256xf32>
    %c0_13 = arith.constant 0 : index
    %c0_14 = arith.constant 0 : index
    %28 = vector.load %arg3[%c0_13, %c0_14] : memref<8x256xf32, #tpu.memory_space<vmem>>, vector<8x256xf32>
    tpu.vector_store %arg3[%c0_13, %c0_14], %27 {strides = array<i32>} : memref<8x256xf32, #tpu.memory_space<vmem>>, vector<8x256xf32>,
    return
  }
  func.func @transform_0(%arg0: i32) -> (i32, i32) {
    %c0_i32 = arith.constant 0 : i32
    %c0_i32_0 = arith.constant 0 : i32
    return %c0_i32, %arg0 : i32, i32
  }
  func.func @transform_1(%arg0: i32) -> (i32, i32) {
    %c0_i32 = arith.constant 0 : i32
    %c0_i32_0 = arith.constant 0 : i32
    %c0_i32_1 = arith.constant 0 : i32
    return %c0_i32, %c0_i32_0 : i32, i32
  }
  func.func @transform_2(%arg0: i32) -> (i32, i32) {
    %c0_i32 = arith.constant 0 : i32
    %c0_i32_0 = arith.constant 0 : i32
    return %c0_i32, %arg0 : i32, i32
  }
}

</mosaic_0001>

<llo_original>
// kernel: actor_critic_forward.1
$region0: #{actor_critic_forward.1}
  #allocation0 [shape = 'u32[]', space=smem, size = 0x4, offset = 0x4, fixed_abs, tag = 'smem constant byte address 0x4 - core index']
  #allocation1 [shape = 'u32[144,128]{1,0:T(1,128)}', space=vmem, size = 0x12000, scoped, tag = 'internal scratch']
  %s0 = inlined_call_operand.vmem [shape: f32[5,512], index: 0, kind: input, shape index: {}]
  %s1 = inlined_call_operand.hbm [shape: f32[96,128], index: 1, kind: input, shape index: {}]
  %s2 = inlined_call_operand.vmem [shape: f32[8,512], index: 2, kind: output, shape index: {}]
  %s3 = sld [smem:[#allocation0]]
  $region45: #{actor_critic_forward.1} parent=0
    _
  %s5 = ssub.s32 1, %s3
  %s6 = scalar_select 0, %s5, %s3
  $region1: #{actor_critic_forward.1} parent=0
    #allocation2 [shape = 'u8[49152]{0}', space=vmem, size = 0xc000, scoped, tag = 'input window, operand 1, single buffered']
    #allocation3 [shape = 's32[2]{0}', space=sflag, size = 0x8, scoped, tag = 'scoped memory for actor_critic_forward.1']
    %7 = vsyncpa [#allocation3], 0
    loop: start=0, step=1, limit=4
    $region2: #{actor_critic_forward.1} parent=1 // loop_pre_header
      _
    $region3: #{actor_critic_forward.1} parent=1 // loop_header
      %s9 = sphi 0, %s13
      %p10 = scmp.ge.s32.totalorder %s9, 4
      %s19 = sphi 0, %s21
      %s22 = sphi 0, %s19
      %s23 = sphi 0, %s22
      %s39 = sphi 0, %s23
      %s43 = sphi 0, %s43
      %s45 = sphi 0, %s43
      %s46 = sphi 0, %s45
      %s60 = sphi 0, %s46
      %s66 = sphi 0, %s68
      %s69 = sphi 0, %s66
      %s70 = sphi 0, %s69
      %s86 = sphi 0, %s70
    $region4: #{actor_critic_forward.1} parent=1 // loop_header_branch
      %12 = sbr.rel (%p10) target = $region8
    $region5: #{actor_critic_forward.1} parent=1 // loop_body
      %s14 = ssub.s32 %s9, 1
      %s15 = ssub.s32 %s9, 2
      %s16 = sadd.s32 %s9, 1
      %s17 = ssub.s32 %s9, %s16
      %p18 = scmp.eq.s32.totalorder %s17, 0
      %s20 = sadd.s32 %s19, 1
      %s21 = scalar_select %p18, %s19, %s20
      %p24 = pneg %p18
      %p25 = scmp.eq.s32.totalorder %s9, 1
      %p26 = por %p24, %p25
      %p27 = scmp.ne.s32.totalorder %s19, %s22
      %p28 = scmp.eq.s32.totalorder %s9, 0
      %p29 = por %p27, %p28
      %p30 = scmp.ne.s32.totalorder %s19, %s22
      %p31 = scmp.eq.s32.totalorder %s14, 1
      %p32 = por %p30, %p31
      %p33 = scmp.ne.s32.totalorder %s22, %s23
      %p34 = scmp.eq.s32.totalorder %s14, 0
      %p35 = por %p33, %p34
      %p36 = scmp.ne.s32.totalorder %s22, %s23
      %p37 = scmp.eq.s32.totalorder %s15, 1
      %p38 = por %p36, %p37
      %p40 = scmp.ne.s32.totalorder %s23, %s39
      %p41 = scmp.eq.s32.totalorder %s15, 0
      %p42 = por %p40, %p41
      %s44 = sadd.s32 %s43, 1
      %p47 = scmp.eq.s32.totalorder %s9, 1
      %p48 = scmp.ne.s32.totalorder %s43, %s45
      %p49 = scmp.eq.s32.totalorder %s9, 0
      %p50 = por %p48, %p49
      %p51 = scmp.ne.s32.totalorder %s43, %s45
      %p52 = scmp.eq.s32.totalorder %s14, 1
      %p53 = por %p51, %p52
      %p54 = scmp.ne.s32.totalorder %s45, %s46
      %p55 = scmp.eq.s32.totalorder %s14, 0
      %p56 = por %p54, %p55
      %p57 = scmp.ne.s32.totalorder %s45, %s46
      %p58 = scmp.eq.s32.totalorder %s15, 1
      %p59 = por %p57, %p58
      %p61 = scmp.ne.s32.totalorder %s46, %s60
      %p62 = scmp.eq.s32.totalorder %s15, 0
      %p63 = por %p61, %p62
      %s64 = ssub.s32 %s9, %s16
      %p65 = scmp.eq.s32.totalorder %s64, 0
      %s67 = sadd.s32 %s66, 1
      %s68 = scalar_select %p65, %s66, %s67
      %p71 = pneg %p65
      %p72 = scmp.eq.s32.totalorder %s9, 1
      %p73 = por %p71, %p72
      %p74 = scmp.ne.s32.totalorder %s66, %s69
      %p75 = scmp.eq.s32.totalorder %s9, 0
      %p76 = por %p74, %p75
      %p77 = scmp.ne.s32.totalorder %s66, %s69
      %p78 = scmp.eq.s32.totalorder %s14, 1
      %p79 = por %p77, %p78
      %p80 = scmp.ne.s32.totalorder %s69, %s70
      %p81 = scmp.eq.s32.totalorder %s14, 0
      %p82 = por %p80, %p81
      %p83 = scmp.ne.s32.totalorder %s69, %s70
      %p84 = scmp.eq.s32.totalorder %s15, 1
      %p85 = por %p83, %p84
      %p87 = scmp.ne.s32.totalorder %s70, %s86
      %p88 = scmp.eq.s32.totalorder %s15, 0
      %p89 = por %p87, %p88
      %p90 = scmp.le.s32.totalorder 1, %s9
      %p91 = scmp.lt.s32.totalorder %s9, 3
      %p92 = pnand %p90, %p91
      %p93 = pneg %p92
      // Predicated region
      $region9: #{actor_critic_forward.1} parent=5 // pred_check
        _
      $region10: #{actor_critic_forward.1} parent=5 // pred_check_branch
        %95 = sbr.rel (%p92) target = $region12
      $region11: #{actor_critic_forward.1} parent=5 // pred_region
        %s96 = ssub.s32 %s9, 1
        // Predicated region
        $region13: #{actor_critic_forward.1} parent=11 // pred_check
          %p97 = pneg %p56
        $region14: #{actor_critic_forward.1} parent=11 // pred_check_branch
          %99 = sbr.rel (%p97) target = $region16
        $region15: #{actor_critic_forward.1} parent=11 // pred_region
          %s101 = ssub.s32 1536, 1536
          %102 = vsyncadd [#allocation3], %s101
          %s103 = sshll.u32 [#allocation2], 4
          %s104 = int_to_ptr.vmem [resolvable:$true] %s103
          %109 = dma.hbm_to_vmem [thread:$0]  %s1, 1536, %s104, [#allocation3], 128, 128, 8
        $region16: #{actor_critic_forward.1} parent=11 // pred_fallthru
          _
      $region12: #{actor_critic_forward.1} parent=5 // pred_fallthru
        _
      %p110 = scmp.lt.s32.totalorder %s9, 2
      // Predicated region
      $region17: #{actor_critic_forward.1} parent=5 // pred_check
        %p111 = pneg %p110
      $region18: #{actor_critic_forward.1} parent=5 // pred_check_branch
        %113 = sbr.rel (%p111) target = $region20
      $region19: #{actor_critic_forward.1} parent=5 // pred_region
        // Predicated region
        $region21: #{actor_critic_forward.1} parent=19 // pred_check
          %p114 = pneg %p29
        $region22: #{actor_critic_forward.1} parent=19 // pred_check_branch
          %116 = sbr.rel (%p114) target = $region24
        $region23: #{actor_critic_forward.1} parent=19 // pred_region
          %s117 = smul.u32 2, %s9
          %p118 = scmp.lt.s32.totalorder %s117, 3
          %s119 = scalar_select %p118, %s117, 3
          %s120 = smul.addr %s119, 8
          %s121 = scalar_lea.vmem %s0, %s120
          %s122 = smul.u32 2, %s9
        $region24: #{actor_critic_forward.1} parent=19 // pred_fallthru
          _
      $region20: #{actor_critic_forward.1} parent=5 // pred_fallthru
        _
      %p123 = scmp.le.s32.totalorder 1, %s9
      %p124 = scmp.lt.s32.totalorder %s9, 3
      %p125 = pnand %p123, %p124
      %p126 = pneg %p125
      // Predicated region
      $region25: #{actor_critic_forward.1} parent=5 // pred_check
        _
      $region26: #{actor_critic_forward.1} parent=5 // pred_check_branch
        %128 = sbr.rel (%p125) target = $region28
      $region27: #{actor_critic_forward.1} parent=5 // pred_region
        %s129 = ssub.s32 %s9, 1
        // Predicated region
        $region29: #{actor_critic_forward.1} parent=27 // pred_check
          %p130 = pneg %p56
        $region30: #{actor_critic_forward.1} parent=27 // pred_check_branch
          %132 = sbr.rel (%p130) target = $region32
        $region31: #{actor_critic_forward.1} parent=27 // pred_region
          %133 = dma.done [#allocation3], 1536
        $region32: #{actor_critic_forward.1} parent=27 // pred_fallthru
          _
        %s134 = smul.u32 2, %s14
        %p135 = scmp.lt.s32.totalorder %s134, 3
        %s136 = scalar_select %p135, %s134, 3
        %s137 = smul.addr %s136, 8
        %s138 = scalar_lea.vmem %s0, %s137
        %p139 = pneg %p35
        %p140 = pneg %p32
        %p141 = pneg %p56
        %p142 = pneg %p53
        %p143 = pneg %p82
        %p144 = pneg %p79
        %s145 = smul.u32 2, %s14
        %p146 = scmp.lt.s32.totalorder %s145, 3
        %s147 = scalar_select %p146, %s145, 3
        %s148 = smul.addr %s147, 8
        %s149 = scalar_lea.vmem %s2, %s148
        %s150 = smul.u32 2, %s14
        %p151 = scmp.lt.s32.totalorder %s150, 3
        %s152 = scalar_select %p151, %s150, 3
        %s153 = smul.addr %s152, 8
        %s154 = scalar_lea.vmem %s0, %s153
        %s155 = smul.u32 2, %s14
        %s156 = smul.u32 2, %s14
        %p157 = scmp.lt.s32.totalorder %s156, 3
        %s158 = scalar_select %p157, %s156, 3
        %s159 = smul.addr %s158, 8
        %s160 = scalar_lea.vmem %s2, %s159
        %s161 = smul.u32 2, %s14
        %v162 = vld [vmem:[%s154] sm:$0x1f]
        %v163 = vld [vmem:[%s154 + $0x8] sm:$0x1f]
        %v164 = vld [vmem:[#allocation2] sm:$0xff]
        %v165 = vld [vmem:[#allocation2 + $0x8] sm:$0xff]
        %v166 = vld [vmem:[#allocation2 + $0x10] sm:$0xff]
        %v167 = vld [vmem:[#allocation2 + $0x18] sm:$0x1]
        %vm168 = vcmask 39936
        %v170 = vsel %vm168, %v164, 0
        %v173 = vsel %vm168, %v165, 0
        %v176 = vsel %vm168, %v166, 0
        %v179 = vsel %vm168, %v167, 0
        %vm181 = vcmask 1044480
        %v183 = vsel %vm181, %v162, 0
        %v186 = vsel %vm181, %v163, 0
        %188 = vmatprep.subr.mxu0 0.0
        %189 = vmatpush1.msra.mxu0 0.0
        %190 = vmatprep.subr.mxu0 0.0
        %191 = vmatpush1.msra.mxu0 0.0
        %192 = vmatprep.subr.mxu0 0.0
        %193 = vmatpush1.msra.mxu0 0.0
        %194 = vmatprep.subr.mxu0 0.0
        %195 = vmatpush1.msra.mxu0 0.0
        %196 = vmatprep.subr.mxu0 0.0
        %197 = vmatpush1.msra.mxu0 0.0
        %198 = vmatprep.subr.mxu0 0.0
        %199 = vmatpush1.msra.mxu0 0.0
        %200 = vmatprep.subr.mxu0 0.0
        %201 = vmatpush1.msra.mxu0 0.0
        %202 = vmatprep.subr.mxu0 0.0
        %203 = vmatpush1.msra.mxu0 0.0
        %204 = vmatprep.subr.mxu0 0.0
        %205 = vmatpush1.msra.mxu0 0.0
        %206 = vmatprep.subr.mxu0 0.0
        %207 = vmatpush1.msra.mxu0 0.0
        %208 = vmatprep.subr.mxu0 0.0
        %209 = vmatpush1.msra.mxu0 0.0
        %210 = vmatprep.subr.mxu0 0.0
        %211 = vmatpush1.msra.mxu0 0.0
        %212 = vmatprep.subr.mxu0 0.0
        %213 = vmatpush1.msra.mxu0 0.0
        %214 = vmatprep.subr.mxu0 0.0
        %215 = vmatpush1.msra.mxu0 0.0
        %216 = vmatprep.subr.mxu0 0.0
        %217 = vmatpush1.msra.mxu0 0.0
        %218 = vmatprep.subr.mxu0 %v186
        %219 = vmatpush1.msra.mxu0 %v183
        %220 = vmatprep.subr.mxu0 0.0
        %221 = vmatpush2.msra.mxu0 0.0
        %222 = vmatprep.subr.mxu0 0.0
        %223 = vmatpush2.msra.mxu0 0.0
        %224 = vmatprep.subr.mxu0 0.0
        %225 = vmatpush2.msra.mxu0 0.0
        %226 = vmatprep.subr.mxu0 0.0
        %227 = vmatpush2.msra.mxu0 0.0
        %228 = vmatprep.subr.mxu0 0.0
        %229 = vmatpush2.msra.mxu0 0.0
        %230 = vmatprep.subr.mxu0 0.0
        %231 = vmatpush2.msra.mxu0 0.0
        %232 = vmatprep.subr.mxu0 0.0
        %233 = vmatpush2.msra.mxu0 0.0
        %234 = vmatprep.subr.mxu0 0.0
        %235 = vmatpush2.msra.mxu0 0.0
        %236 = vmatprep.subr.mxu0 0.0
        %237 = vmatpush2.msra.mxu0 0.0
        %238 = vmatprep.subr.mxu0 0.0
        %239 = vmatpush2.msra.mxu0 0.0
        %240 = vmatprep.subr.mxu0 0.0
        %241 = vmatpush2.msra.mxu0 0.0
        %242 = vmatprep.subr.mxu0 0.0
        %243 = vmatpush2.msra.mxu0 0.0
        %244 = vmatprep.subr.mxu0 0.0
        %245 = vmatpush2.msra.mxu0 0.0
        %246 = vmatprep.subr.mxu0 0.0
        %247 = vmatpush2.msra.mxu0 0.0
        %248 = vmatprep.subr.mxu0 0.0
        %249 = vmatpush2.msra.mxu0 0.0
        %250 = vmatprep.subr.mxu0 0.0
        %251 = vmatpush2.msra.mxu0 0.0
        %252 = vmatprep.mubr.f32.mxu0 0.0
        %253 = vmatmul.mubr.f32.gmra.mxu0 %v170
        %v254 = vpop.f32.mrf.mxu0
        %v255 = vadd.f32 0.0, %v254
        %v256 = vpop.f32.mrf.mxu0
        %v257 = vadd.f32 0.0, %v256
        %258 = vmatprep.mubr.f32.mxu0 0.0
        %259 = vmatmul.mubr.f32.gmra.mxu0 %v173
        %v260 = vpop.f32.mrf.mxu0
        %v261 = vadd.f32 0.0, %v260
        %v262 = vpop.f32.mrf.mxu0
        %v263 = vadd.f32 0.0, %v262
        %264 = vmatprep.mubr.f32.mxu0 0.0
        %265 = vmatmul.mubr.f32.gmra.mxu0 %v176
        %v266 = vpop.f32.mrf.mxu0
        %v267 = vadd.f32 0.0, %v266
        %v268 = vpop.f32.mrf.mxu0
        %v269 = vadd.f32 0.0, %v268
        %270 = vmatprep.mubr.f32.mxu0 0.0
        %271 = vmatmul.mubr.f32.gmra.mxu0 %v179
        %v272 = vpop.f32.mrf.mxu0
        %v273 = vadd.f32 0.0, %v272
        %v274 = vpop.f32.mrf.mxu0
        %v275 = vadd.f32 0.0, %v274
        %276 = vdwg.mxu0
        %v277 = vmax.f32 %v255, 0.0
        %v278 = vmax.f32 %v257, 0.0
        %v279 = vmax.f32 %v261, 0.0
        %v280 = vmax.f32 %v263, 0.0
        %v281 = vmax.f32 %v267, 0.0
        %v282 = vmax.f32 %v269, 0.0
        %v283 = vmax.f32 %v273, 0.0
        %v284 = vmax.f32 %v275, 0.0
        %v285 = vld [vmem:[#allocation2 + $0x20] sm:$0xff]
        %v286 = vld [vmem:[#allocation2 + $0x28] sm:$0xff]
        %v287 = vld [vmem:[#allocation2 + $0x30] sm:$0xff]
        %v288 = vld [vmem:[#allocation2 + $0x38] sm:$0xff]
        %v289 = vld [vmem:[#allocation2 + $0x40] sm:$0xff]
        %v290 = vld [vmem:[#allocation2 + $0x48] sm:$0xff]
        %v291 = vld [vmem:[#allocation2 + $0x50] sm:$0x1]
        %vm292 = vcmask 203776
        %v294 = vsel %vm292, %v285, 0
        %v297 = vsel %vm292, %v286, 0
        %v300 = vsel %vm292, %v287, 0
        %v303 = vsel %vm292, %v288, 0
        %v306 = vsel %vm292, %v289, 0
        %v309 = vsel %vm292, %v290, 0
        %v312 = vsel %vm292, %v291, 0
        %vm314 = vcmask 1040384
        %v316 = vsel %vm314, %v283, 0
        %v319 = vsel %vm314, %v284, 0
        %321 = vmatprep.subr.mxu0 0.0
        %322 = vmatpush1.msra.mxu0 0.0
        %323 = vmatprep.subr.mxu0 0.0
        %324 = vmatpush1.msra.mxu0 0.0
        %325 = vmatprep.subr.mxu0 0.0
        %326 = vmatpush1.msra.mxu0 0.0
        %327 = vmatprep.subr.mxu0 0.0
        %328 = vmatpush1.msra.mxu0 0.0
        %329 = vmatprep.subr.mxu0 0.0
        %330 = vmatpush1.msra.mxu0 0.0
        %331 = vmatprep.subr.mxu0 0.0
        %332 = vmatpush1.msra.mxu0 0.0
        %333 = vmatprep.subr.mxu0 0.0
        %334 = vmatpush1.msra.mxu0 0.0
        %335 = vmatprep.subr.mxu0 0.0
        %336 = vmatpush1.msra.mxu0 0.0
        %337 = vmatprep.subr.mxu0 0.0
        %338 = vmatpush1.msra.mxu0 0.0
        %339 = vmatprep.subr.mxu0 0.0
        %340 = vmatpush1.msra.mxu0 0.0
        %341 = vmatprep.subr.mxu0 0.0
        %342 = vmatpush1.msra.mxu0 0.0
        %343 = vmatprep.subr.mxu0 0.0
        %344 = vmatpush1.msra.mxu0 0.0
        %345 = vmatprep.subr.mxu0 %v319
        %346 = vmatpush1.msra.mxu0 %v316
        %347 = vmatprep.subr.mxu0 %v282
        %348 = vmatpush1.msra.mxu0 %v281
        %349 = vmatprep.subr.mxu0 %v280
        %350 = vmatpush1.msra.mxu0 %v279
        %351 = vmatprep.subr.mxu0 %v278
        %352 = vmatpush1.msra.mxu0 %v277
        %353 = vmatprep.subr.mxu0 0.0
        %354 = vmatpush2.msra.mxu0 0.0
        %355 = vmatprep.subr.mxu0 0.0
        %356 = vmatpush2.msra.mxu0 0.0
        %357 = vmatprep.subr.mxu0 0.0
        %358 = vmatpush2.msra.mxu0 0.0
        %359 = vmatprep.subr.mxu0 0.0
        %360 = vmatpush2.msra.mxu0 0.0
        %361 = vmatprep.subr.mxu0 0.0
        %362 = vmatpush2.msra.mxu0 0.0
        %363 = vmatprep.subr.mxu0 0.0
        %364 = vmatpush2.msra.mxu0 0.0
        %365 = vmatprep.subr.mxu0 0.0
        %366 = vmatpush2.msra.mxu0 0.0
        %367 = vmatprep.subr.mxu0 0.0
        %368 = vmatpush2.msra.mxu0 0.0
        %369 = vmatprep.subr.mxu0 0.0
        %370 = vmatpush2.msra.mxu0 0.0
        %371 = vmatprep.subr.mxu0 0.0
        %372 = vmatpush2.msra.mxu0 0.0
        %373 = vmatprep.subr.mxu0 0.0
        %374 = vmatpush2.msra.mxu0 0.0
        %375 = vmatprep.subr.mxu0 0.0
        %376 = vmatpush2.msra.mxu0 0.0
        %377 = vmatprep.subr.mxu0 0.0
        %378 = vmatpush2.msra.mxu0 0.0
        %379 = vmatprep.subr.mxu0 0.0
        %380 = vmatpush2.msra.mxu0 0.0
        %381 = vmatprep.subr.mxu0 0.0
        %382 = vmatpush2.msra.mxu0 0.0
        %383 = vmatprep.subr.mxu0 0.0
        %384 = vmatpush2.msra.mxu0 0.0
        %385 = vmatprep.mubr.f32.mxu0 0.0
        %386 = vmatmul.mubr.f32.gmra.mxu0 %v294
        %v387 = vpop.f32.mrf.mxu0
        %v388 = vadd.f32 0.0, %v387
        %v389 = vpop.f32.mrf.mxu0
        %v390 = vadd.f32 0.0, %v389
        %391 = vmatprep.mubr.f32.mxu0 0.0
        %392 = vmatmul.mubr.f32.gmra.mxu0 %v297
        %v393 = vpop.f32.mrf.mxu0
        %v394 = vadd.f32 0.0, %v393
        %v395 = vpop.f32.mrf.mxu0
        %v396 = vadd.f32 0.0, %v395
        %397 = vmatprep.mubr.f32.mxu0 0.0
        %398 = vmatmul.mubr.f32.gmra.mxu0 %v300
        %v399 = vpop.f32.mrf.mxu0
        %v400 = vadd.f32 0.0, %v399
        %v401 = vpop.f32.mrf.mxu0
        %v402 = vadd.f32 0.0, %v401
        %403 = vmatprep.mubr.f32.mxu0 0.0
        %404 = vmatmul.mubr.f32.gmra.mxu0 %v303
        %v405 = vpop.f32.mrf.mxu0
        %v406 = vadd.f32 0.0, %v405
        %v407 = vpop.f32.mrf.mxu0
        %v408 = vadd.f32 0.0, %v407
        %409 = vmatprep.mubr.f32.mxu0 0.0
        %410 = vmatmul.mubr.f32.gmra.mxu0 %v306
        %v411 = vpop.f32.mrf.mxu0
        %v412 = vadd.f32 0.0, %v411
        %v413 = vpop.f32.mrf.mxu0
        %v414 = vadd.f32 0.0, %v413
        %415 = vmatprep.mubr.f32.mxu0 0.0
        %416 = vmatmul.mubr.f32.gmra.mxu0 %v309
        %v417 = vpop.f32.mrf.mxu0
        %v418 = vadd.f32 0.0, %v417
        %v419 = vpop.f32.mrf.mxu0
        %v420 = vadd.f32 0.0, %v419
        %421 = vmatprep.mubr.f32.mxu0 0.0
        %422 = vmatmul.mubr.f32.gmra.mxu0 %v312
        %v423 = vpop.f32.mrf.mxu0
        %v424 = vadd.f32 0.0, %v423
        %v425 = vpop.f32.mrf.mxu0
        %v426 = vadd.f32 0.0, %v425
        %427 = vdwg.mxu0
        %v428 = vmax.f32 %v388, 0.0
        %v429 = vmax.f32 %v390, 0.0
        %v430 = vmax.f32 %v394, 0.0
        %v431 = vmax.f32 %v396, 0.0
        %v432 = vmax.f32 %v400, 0.0
        %v433 = vmax.f32 %v402, 0.0
        %v434 = vmax.f32 %v406, 0.0
        %v435 = vmax.f32 %v408, 0.0
        %v436 = vmax.f32 %v412, 0.0
        %v437 = vmax.f32 %v414, 0.0
        %v438 = vmax.f32 %v418, 0.0
        %v439 = vmax.f32 %v420, 0.0
        %v440 = vmax.f32 %v424, 0.0
        %v441 = vmax.f32 %v426, 0.0
        %v442 = vld [vmem:[#allocation2 + $0x58] sm:$0xff]
        %vm443 = vcmask 400384
        %v445 = vsel %vm443, %v442, 0
        %v448 = vsel %vm314, %v440, 0
        %v451 = vsel %vm314, %v441, 0
        %453 = vmatprep.subr.mxu0 0.0
        %454 = vmatpush1.msra.mxu0 0.0
        %455 = vmatprep.subr.mxu0 0.0
        %456 = vmatpush1.msra.mxu0 0.0
        %457 = vmatprep.subr.mxu0 0.0
        %458 = vmatpush1.msra.mxu0 0.0
        %459 = vmatprep.subr.mxu0 0.0
        %460 = vmatpush1.msra.mxu0 0.0
        %461 = vmatprep.subr.mxu0 0.0
        %462 = vmatpush1.msra.mxu0 0.0
        %463 = vmatprep.subr.mxu0 0.0
        %464 = vmatpush1.msra.mxu0 0.0
        %465 = vmatprep.subr.mxu0 0.0
        %466 = vmatpush1.msra.mxu0 0.0
        %467 = vmatprep.subr.mxu0 0.0
        %468 = vmatpush1.msra.mxu0 0.0
        %469 = vmatprep.subr.mxu0 0.0
        %470 = vmatpush1.msra.mxu0 0.0
        %471 = vmatprep.subr.mxu0 %v451
        %472 = vmatpush1.msra.mxu0 %v448
        %473 = vmatprep.subr.mxu0 %v439
        %474 = vmatpush1.msra.mxu0 %v438
        %475 = vmatprep.subr.mxu0 %v437
        %476 = vmatpush1.msra.mxu0 %v436
        %477 = vmatprep.subr.mxu0 %v435
        %478 = vmatpush1.msra.mxu0 %v434
        %479 = vmatprep.subr.mxu0 %v433
        %480 = vmatpush1.msra.mxu0 %v432
        %481 = vmatprep.subr.mxu0 %v431
        %482 = vmatpush1.msra.mxu0 %v430
        %483 = vmatprep.subr.mxu0 %v429
        %484 = vmatpush1.msra.mxu0 %v428
        %485 = vmatprep.subr.mxu0 0.0
        %486 = vmatpush2.msra.mxu0 0.0
        %487 = vmatprep.subr.mxu0 0.0
        %488 = vmatpush2.msra.mxu0 0.0
        %489 = vmatprep.subr.mxu0 0.0
        %490 = vmatpush2.msra.mxu0 0.0
        %491 = vmatprep.subr.mxu0 0.0
        %492 = vmatpush2.msra.mxu0 0.0
        %493 = vmatprep.subr.mxu0 0.0
        %494 = vmatpush2.msra.mxu0 0.0
        %495 = vmatprep.subr.mxu0 0.0
        %496 = vmatpush2.msra.mxu0 0.0
        %497 = vmatprep.subr.mxu0 0.0
        %498 = vmatpush2.msra.mxu0 0.0
        %499 = vmatprep.subr.mxu0 0.0
        %500 = vmatpush2.msra.mxu0 0.0
        %501 = vmatprep.subr.mxu0 0.0
        %502 = vmatpush2.msra.mxu0 0.0
        %503 = vmatprep.subr.mxu0 0.0
        %504 = vmatpush2.msra.mxu0 0.0
        %505 = vmatprep.subr.mxu0 0.0
        %506 = vmatpush2.msra.mxu0 0.0
        %507 = vmatprep.subr.mxu0 0.0
        %508 = vmatpush2.msra.mxu0 0.0
        %509 = vmatprep.subr.mxu0 0.0
        %510 = vmatpush2.msra.mxu0 0.0
        %511 = vmatprep.subr.mxu0 0.0
        %512 = vmatpush2.msra.mxu0 0.0
        %513 = vmatprep.subr.mxu0 0.0
        %514 = vmatpush2.msra.mxu0 0.0
        %515 = vmatprep.subr.mxu0 0.0
        %516 = vmatpush2.msra.mxu0 0.0
        %517 = vmatprep.mubr.f32.mxu0 0.0
        %518 = vmatmul.mubr.f32.gmra.mxu0 %v445
        %v519 = vpop.f32.mrf.mxu0
        %v520 = vadd.f32 0.0, %v519
        %v521 = vpop.f32.mrf.mxu0
        %v522 = vadd.f32 0.0, %v521
        %523 = vdwg.mxu0
        %v524 = vlaneseq
        %v525 = vshrl.u32 %v524, 7
        %vm526 = vcmp.lt.s32.totalorder %v525, 2
        %v527 = vsel %vm526, %v520, -1e+30
        %v528 = vsel %vm526, %v522, -1e+30
        %v529 = vrot.slane %v527, 4
        %v530 = vmax.f32 %v527, %v529
        %v531 = vrot.slane %v530, 2
        %v532 = vmax.f32 %v530, %v531
        %v533 = vrot.slane %v532, 1
        %v534 = vmax.f32 %v532, %v533
        %v535 = vrot.slane %v528, 4
        %v536 = vmax.f32 %v528, %v535
        %v537 = vrot.slane %v536, 2
        %v538 = vmax.f32 %v536, %v537
        %v539 = vrot.slane %v538, 1
        %v540 = vmax.f32 %v538, %v539
        %v541 = vsub.f32 %v527, %v534
        %v542 = vsub.f32 %v528, %v540
        %v543 = vmul.f32 %v541, 1.442695
        %v544 = vpow.pop %v543
        %v545 = vmul.f32 %v542, 1.442695
        %v546 = vpow.pop %v545
        %v547 = vrot.slane %v544, 4
        %v548 = vadd.f32 %v544, %v547
        %v549 = vrot.slane %v548, 2
        %v550 = vadd.f32 %v548, %v549
        %v551 = vrot.slane %v550, 1
        %v552 = vadd.f32 %v550, %v551
        %v553 = vrot.slane %v546, 4
        %v554 = vadd.f32 %v546, %v553
        %v555 = vrot.slane %v554, 2
        %v556 = vadd.f32 %v554, %v555
        %v557 = vrot.slane %v556, 1
        %v558 = vadd.f32 %v556, %v557
        %v559 = vrcp.pop %v552
        %v560 = vmul.f32 %v544, %v559
        %v561 = vrcp.pop %v558
        %v562 = vmul.f32 %v546, %v561
        %vm563 = vcmp.eq.s32.totalorder %v525, 2
        %v564 = vsel %vm563, %v520, %v560
        %v565 = vsel %vm563, %v522, %v562
        %566 = vst [vmem:[%s160] sm:$0xff] %v564
        %567 = vst [vmem:[%s160 + $0x8] sm:$0xff] %v565
        %s568 = smul.u32 2, %s14
        %p569 = scmp.lt.s32.totalorder %s568, 3
        %s570 = scalar_select %p569, %s568, 3
        %s571 = smul.addr %s570, 8
        %s572 = scalar_lea.vmem %s2, %s571
        // Predicated region
        $region33: #{actor_critic_forward.1} parent=27 // pred_check
          %p573 = pneg %p79
        $region34: #{actor_critic_forward.1} parent=27 // pred_check_branch
          %575 = sbr.rel (%p573) target = $region36
        $region35: #{actor_critic_forward.1} parent=27 // pred_region
          %s576 = smul.u32 2, %s14
        $region36: #{actor_critic_forward.1} parent=27 // pred_fallthru
          _
      $region28: #{actor_critic_forward.1} parent=5 // pred_fallthru
        _
      %p577 = scmp.le.s32.totalorder 2, %s9
      // Predicated region
      $region37: #{actor_critic_forward.1} parent=5 // pred_check
        %p578 = pneg %p577
      $region38: #{actor_critic_forward.1} parent=5 // pred_check_branch
        %580 = sbr.rel (%p578) target = $region40
      $region39: #{actor_critic_forward.1} parent=5 // pred_region
        %s581 = ssub.s32 %s9, 2
        // Predicated region
        $region41: #{actor_critic_forward.1} parent=39 // pred_check
          %p582 = pneg %p85
        $region42: #{actor_critic_forward.1} parent=39 // pred_check_branch
          %584 = sbr.rel (%p582) target = $region44
        $region43: #{actor_critic_forward.1} parent=39 // pred_region
          %s585 = smul.u32 2, %s15
          %p586 = scmp.lt.s32.totalorder %s585, 3
          %s587 = scalar_select %p586, %s585, 3
          %s588 = smul.addr %s587, 8
          %s589 = scalar_lea.vmem %s2, %s588
        $region44: #{actor_critic_forward.1} parent=39 // pred_fallthru
          _
      $region40: #{actor_critic_forward.1} parent=5 // pred_fallthru
        _
    $region6: #{actor_critic_forward.1} parent=1 // loop_footer
      %s13 = sadd.s32 1, %s9
    $region7: #{actor_critic_forward.1} parent=1 // loop_footer_branch
      %8 = sbr.rel target = $region3
    $region8: #{actor_critic_forward.1} parent=1 // loop_exit
      _
    %590 = vsyncpa [#allocation3], 1
    %s591 = scalar_lea.sflag [#allocation3], 1
    %592 = vsyncpa %s591, 1

</llo_original>
